<compile_context>
chip_gen: v5e
topology: v5e:2x2
jax: 0.10.0
libtpu: 0.0.40
codegen_flags: <defaults>
</compile_context>

<pallas_src>
import functools

import jax
import jax.numpy as jnp
from jax.experimental import pallas as pl
from jax.experimental.pallas import tpu as pltpu


def _cat_tanh_kernel(x_ref, o_ref, *, k, compute_f32):
    xv = x_ref[...]
    if compute_f32 and xv.dtype != jnp.float32:
        t = jnp.tanh(xv.astype(jnp.float32)).astype(o_ref.dtype)
    else:
        t = jnp.tanh(xv).astype(o_ref.dtype)
    # Duplicate-concat along dim 1 == two lane-range stores of the same tile.
    o_ref[:, :k] = t
    o_ref[:, k:] = t


def _pick_row_tile(b, row_bytes, target_bytes=2 << 20):
    """Largest multiple-of-8 divisor of b whose input tile is <= target_bytes.

    Falls back to the full extent (exempt from the (8,128) rule) when b is
    small or no such divisor exists.
    """
    if b <= 8:
        return b
    max_rows = max(8, target_bytes // max(1, row_bytes))
    best = 0
    tb = 8
    while tb <= min(b, max_rows):
        if b % tb == 0:
            best = tb
        tb += 8
    return best if best else b


def cat_tanh(x, *, compute_f32=False):
    B, C, L = x.shape
    K = C * L

    # Lane-dense 2-D slab: (B, C, L) -> (B, K). Free contiguous view.
    x2d = x.reshape(B, K)

    itemsize = jnp.dtype(x.dtype).itemsize
    TB = _pick_row_tile(B, K * itemsize)
    grid = (B // TB,)

    in_bytes = B * K * itemsize
    cost = pl.CostEstimate(
        flops=0,
        transcendentals=B * K,
        bytes_accessed=3 * in_bytes,  # 1x read + 2x write
    )

    kernel = functools.partial(_cat_tanh_kernel, k=K, compute_f32=compute_f32)

    out = pl.pallas_call(
        kernel,
        out_shape=jax.ShapeDtypeStruct((B, 2 * K), x.dtype),
        grid=grid,
        # Last block dim is the full array extent -> no (8,128) divisibility
        # issue regardless of C*L; row dim is either a multiple of 8 or the
        # full extent.
        in_specs=[pl.BlockSpec((TB, K), lambda i: (i, 0))],
        out_specs=pl.BlockSpec((TB, 2 * K), lambda i: (i, 0)),
        compiler_params=pltpu.CompilerParams(
            dimension_semantics=("parallel",),
            vmem_limit_bytes=32 * 1024 * 1024,
        ),
        cost_estimate=cost,
    )(x2d)

    # (B, 2K) -> (B, 2, C, L) -> (B, 2C, L): contiguous views; exactly the
    # concat along dim 1 followed by nothing (tanh already applied).
    return out.reshape(B, 2 * C, L)


if __name__ == "__main__":
    key = jax.random.PRNGKey(0)
    x = jax.random.normal(key, (2, 3, 4), dtype=jnp.float32)

    out = cat_tanh(x)
    jax.block_until_ready(out)

    # Reference (matches torch.tanh(torch.cat((x, x), dim=1))).
    ref = jnp.tanh(jnp.concatenate([x, x], axis=1))
    assert out.shape == (2, 6, 4), f"bad shape {out.shape}"
    assert jnp.allclose(out, ref, atol=1e-6), "mismatch vs reference"

    print("KERNEL_OK")
</pallas_src>

<mosaic_0001>
module attributes {stable_mosaic.version = 11 : i64} {
  func.func @_cat_tanh_kernel(%arg0: i32, %arg1: memref<2x12xf32, #tpu.memory_space<vmem>>, %arg2: memref<2x24xf32, #tpu.memory_space<vmem>>) attributes {dimension_semantics = [#tpu.dimension_semantics<parallel>], iteration_bounds = array<i64: 1>, scalar_prefetch = 0 : i64, scratch_operands = 0 : i64, tpu.core_type = #tpu.core_type<tc>, window_params = [{transform_indices = @transform_0, window_bounds = array<i64: 2, 12>}, {transform_indices = @transform_1, window_bounds = array<i64: 2, 24>}]} {
    %c0 = arith.constant 0 : index
    %c0_0 = arith.constant 0 : index
    %0 = vector.load %arg1[%c0, %c0_0] : memref<2x12xf32, #tpu.memory_space<vmem>>, vector<2x12xf32>
    %1 = math.tanh %0 : vector<2x12xf32>
    %c0_1 = arith.constant 0 : index
    %c0_2 = arith.constant 0 : index
    %2 = vector.load %arg2[%c0_1, %c0_2] : memref<2x24xf32, #tpu.memory_space<vmem>>, vector<2x12xf32>
    tpu.vector_store %arg2[%c0_1, %c0_2], %1 {strides = array<i32>} : memref<2x24xf32, #tpu.memory_space<vmem>>, vector<2x12xf32>,
    %c0_3 = arith.constant 0 : index
    %c12 = arith.constant 12 : index
    %3 = vector.load %arg2[%c0_3, %c12] : memref<2x24xf32, #tpu.memory_space<vmem>>, vector<2x12xf32>
    tpu.vector_store %arg2[%c0_3, %c12], %1 {strides = array<i32>} : memref<2x24xf32, #tpu.memory_space<vmem>>, vector<2x12xf32>,
    return
  }
  func.func @transform_0(%arg0: i32) -> (i32, i32) {
    %c0_i32 = arith.constant 0 : i32
    %c0_i32_0 = arith.constant 0 : i32
    return %arg0, %c0_i32 : i32, i32
  }
  func.func @transform_1(%arg0: i32) -> (i32, i32) {
    %c0_i32 = arith.constant 0 : i32
    %c0_i32_0 = arith.constant 0 : i32
    return %arg0, %c0_i32 : i32, i32
  }
}

</mosaic_0001>

<llo_original>
// kernel: tpu_custom_call.1
$region0: #{tpu_custom_call.1}
  #allocation0 [shape = 'u32[]', space=smem, size = 0x4, offset = 0x4, fixed_abs, tag = 'smem constant byte address 0x4 - core index']
  #allocation1 [shape = 'u32[72,128]{1,0:T(1,128)}', space=vmem, size = 0x9000, scoped, tag = 'internal scratch']
  %s0 = inlined_call_operand.hbm [shape: f32[2,12], index: 0, kind: input, shape index: {}]
  %s1 = inlined_call_operand.hbm [shape: f32[2,24], index: 1, kind: output, shape index: {}]
  %s2 = sld [smem:[#allocation0]]
  $region18: #{tpu_custom_call.1} parent=0
    _
  %s4 = ssub.s32 1, %s2
  %s5 = scalar_select 0, %s4, %s2
  $region1: #{tpu_custom_call.1} parent=0
    #allocation2 [shape = 'u8[1024]{0}', space=vmem, size = 0x400, scoped, tag = 'input window, operand 0, single buffered']
    #allocation3 [shape = 's32[1]{0}', space=sflag, size = 0x4, scoped, tag = 'scoped memory for tpu_custom_call.1']
    #allocation4 [shape = 's32[1]{0}', space=sflag, size = 0x4, scoped, tag = 'scoped memory for tpu_custom_call.1']
    #allocation5 [shape = 'u8[1024]{0}', space=vmem, size = 0x400, scoped, tag = 'output window, operand 0, single buffered']
    %6 = vsyncpa [#allocation3], 0
    %7 = vsyncpa [#allocation4], 0
    // Predicated region
    $region2: #{tpu_custom_call.1} parent=1 // pred_check
      _
    $region3: #{tpu_custom_call.1} parent=1 // pred_check_branch
      %9 = sbr.rel (0) target = $region5
    $region4: #{tpu_custom_call.1} parent=1 // pred_region
      %11 = vsyncadd [#allocation3], 0
      %s13 = sshll.u32 %s0, 4
      %s14 = int_to_ptr.hbm [resolvable:$true] %s13
      %s15 = sshll.u32 [#allocation2], 4
      %s16 = int_to_ptr.vmem [resolvable:$true] %s15
      %18 = dma.hbm_to_vmem [thread:$0]  %s14, 32, %s16, [#allocation3]
    $region5: #{tpu_custom_call.1} parent=1 // pred_fallthru
      _
    // Predicated region
    $region6: #{tpu_custom_call.1} parent=1 // pred_check
      _
    $region7: #{tpu_custom_call.1} parent=1 // pred_check_branch
      %20 = sbr.rel (0) target = $region9
    $region8: #{tpu_custom_call.1} parent=1 // pred_region
      %22 = dma.done [#allocation3], 32
    $region9: #{tpu_custom_call.1} parent=1 // pred_fallthru
      _
    %v23 = vld [vmem:[#allocation2] sm:$0x3]
    %v24 = vtanh.pop %v23
    %vm25 = vcmask 91136
    %26 = vst.msk [vmem:[#allocation5] sm:$0x3] %vm25, %v24
    %28 = vrot.lane.b32.xlu0 %v24, 12
    %v29 = vpop.permute.xlu0 %28
    %vm31 = vcmask 189536
    %32 = vst.msk [vmem:[#allocation5] sm:$0x3] %vm31, %v29
    // Predicated region
    $region10: #{tpu_custom_call.1} parent=1 // pred_check
      _
    $region11: #{tpu_custom_call.1} parent=1 // pred_check_branch
      %34 = sbr.rel (0) target = $region13
    $region12: #{tpu_custom_call.1} parent=1 // pred_region
      %36 = vsyncadd [#allocation4], 0
      %s38 = sshll.u32 [#allocation5], 4
      %s39 = int_to_ptr.vmem [resolvable:$true] %s38
      %s40 = sshll.u32 %s1, 4
      %s41 = int_to_ptr.hbm [resolvable:$true] %s40
      %43 = dma.vmem_to_hbm [thread:$0]  %s39, 32, %s41, [#allocation4]
    $region13: #{tpu_custom_call.1} parent=1 // pred_fallthru
      _
    // Predicated region
    $region14: #{tpu_custom_call.1} parent=1 // pred_check
      _
    $region15: #{tpu_custom_call.1} parent=1 // pred_check_branch
      %45 = sbr.rel (0) target = $region17
    $region16: #{tpu_custom_call.1} parent=1 // pred_region
      %47 = dma.done [#allocation4], 32
    $region17: #{tpu_custom_call.1} parent=1 // pred_fallthru
      _
    %48 = vsyncpa [#allocation3], 1
    %49 = vsyncpa [#allocation4], 1

</llo_original>
